<compile_context>
chip_gen: v7x
topology: tpu7x:2x2x1
jax: 0.10.0
libtpu: 0.0.40
codegen_flags: <defaults>
</compile_context>

<pallas_src>
import jax
import jax.numpy as jnp
from jax.experimental import pallas as pl
from jax.experimental.pallas import tpu as pltpu


DIST_THRESHOLD = 10.0  # adjacency distance threshold (meters)
_LANE = 128
_SUBLANE = 8


def _gcn_kernel(feats_ref, pos_c_ref, pos_r_ref, w_ref, b_ref, out_ref):
    # Per grid step (one batch):
    #   feats_ref: (1, Np, F)   features (unpadded feature dim)
    #   pos_c_ref: (1, Np, 2)   positions, column orientation
    #   pos_r_ref: (1, 2,  Np)  positions, row orientation
    #   w_ref:     (F, Dp)      lane-padded weight  (resident across steps)
    #   b_ref:     (1, Dp)      lane-padded bias    (resident across steps)
    #   out_ref:   (1, Np, Dp)  lane-dense output block
    n_p = feats_ref.shape[1]
    d_p = out_ref.shape[2]
    thr2 = DIST_THRESHOLD * DIST_THRESHOLD

    # Pairwise squared distances via pure VPU broadcasts (no XLU transpose).
    xc = pos_c_ref[0, :, 0:1]          # (Np, 1)
    yc = pos_c_ref[0, :, 1:2]          # (Np, 1)
    xr = pos_r_ref[0, 0:1, :]          # (1, Np)
    yr = pos_r_ref[0, 1:2, :]          # (1, Np)
    dx = xc - xr                       # (Np, Np)
    dy = yc - yr
    d2 = dx * dx + dy * dy

    # Threshold adjacency (self-loops included since d2[i,i] == 0).
    adj = jnp.where(d2 < thr2, 1.0, 0.0)                              # (Np, Np)
    deg = jnp.maximum(jnp.sum(adj, axis=-1, keepdims=True), 1.0)      # (Np, 1)
    inv_deg = pl.reciprocal(deg, approx=True)

    # Projection first (associativity hoist): xw = X @ W, then message passing
    # on the already-projected features.
    xw = jnp.dot(feats_ref[0], w_ref[...],
                 preferred_element_type=jnp.float32)                  # (Np, Dp)

    if n_p > d_p:
        # Cheaper to scale the matmul output rows (Np*Dp mults) and A stays
        # exact {0,1}.
        h = jnp.dot(adj, xw, preferred_element_type=jnp.float32) * inv_deg
    else:
        # At small Np, folding 1/deg into the adjacency is equally cheap.
        h = jnp.dot(adj * inv_deg, xw, preferred_element_type=jnp.float32)

    h = h + b_ref[...]
    out_ref[0, :, :] = jnp.maximum(h, 0.0).astype(out_ref.dtype)


def _round_up(x, m):
    return ((x + m - 1) // m) * m


def interaction_gcn_layer(agent_feats, agent_pos, weight, bias):
    """agent_feats: [B,N,F], agent_pos: [B,N,2], weight: [F,D], bias: [1,D] -> [B,N,D]"""
    B, N, F = agent_feats.shape
    D = weight.shape[1]

    # Sublane alignment for small N; full-lane alignment once N is large so the
    # adj @ xw contraction and the row-sum reduce use full MXU/XLU tiles.
    align = _LANE if N >= _LANE else _SUBLANE
    Np = _round_up(N, align)
    Dp = _round_up(D, _LANE)  # lane-dense output dim -> unmasked vst

    # Zero-pad features; place padded agents far away (shared sentinel: padded
    # agents connect only to each other, and their rows are sliced off below).
    feats_p = jnp.zeros((B, Np, F), agent_feats.dtype).at[:, :N, :].set(agent_feats)
    pos_c = jnp.full((B, Np, 2), 1e9, agent_pos.dtype).at[:, :N, :].set(agent_pos)
    pos_r = jnp.transpose(pos_c, (0, 2, 1))                     # (B, 2, Np)
    w_p = jnp.zeros((F, Dp), weight.dtype).at[:, :D].set(weight)
    b_p = jnp.zeros((1, Dp), bias.dtype).at[:, :D].set(bias.reshape(1, D))

    out_p = pl.pallas_call(
        _gcn_kernel,
        out_shape=jax.ShapeDtypeStruct((B, Np, Dp), agent_feats.dtype),
        grid_spec=pltpu.PrefetchScalarGridSpec(
            num_scalar_prefetch=0,
            grid=(B,),  # one batch per step; pipelined, megacore-parallel
            in_specs=[
                pl.BlockSpec((1, Np, F), lambda b: (b, 0, 0)),
                pl.BlockSpec((1, Np, 2), lambda b: (b, 0, 0)),
                pl.BlockSpec((1, 2, Np), lambda b: (b, 0, 0)),
                pl.BlockSpec((F, Dp), lambda b: (0, 0)),   # resident weight
                pl.BlockSpec((1, Dp), lambda b: (0, 0)),   # resident bias
            ],
            out_specs=pl.BlockSpec((1, Np, Dp), lambda b: (b, 0, 0)),
        ),
        compiler_params=pltpu.CompilerParams(
            dimension_semantics=("parallel",),
            # Well under v7x's 64 MiB physical VMEM (tightest of v5e/v6e/v7x).
            vmem_limit_bytes=32 * 1024 * 1024,
        ),
    )(feats_p, pos_c, pos_r, w_p, b_p)

    # Strip agent / lane padding: (B, Np, Dp) -> (B, N, D).
    return out_p[:, :N, :D]


def _reference(agent_feats, agent_pos, weight, bias):
    # Pure-JAX reference of the original (A @ X) / deg @ W formulation.
    d2 = jnp.sum(
        (agent_pos[:, :, None, :] - agent_pos[:, None, :, :]) ** 2, axis=-1
    )
    adj = (d2 < DIST_THRESHOLD ** 2).astype(jnp.float32)
    deg = jnp.maximum(jnp.sum(adj, axis=-1, keepdims=True), 1.0)
    msg = jnp.einsum("bij,bjf->bif", adj, agent_feats) / deg
    return jax.nn.relu(jnp.einsum("bif,fd->bid", msg, weight) + bias)


if __name__ == "__main__":
    key = jax.random.PRNGKey(0)
    B, N, F, OUT = 2, 16, 32, 32

    k_feats, k_pos, k_w, k_b = jax.random.split(key, 4)
    agent_feats = jax.random.normal(k_feats, (B, N, F), dtype=jnp.float32)
    agent_pos = jax.random.uniform(
        k_pos, (B, N, 2), dtype=jnp.float32, minval=-15.0, maxval=15.0
    )
    # Deterministic parameter init (synthetic; matches nn.Linear(in_dim, out_dim) shapes).
    bound = 1.0 / (F ** 0.5)
    weight = jax.random.uniform(k_w, (F, OUT), dtype=jnp.float32,
                                minval=-bound, maxval=bound)
    bias = jax.random.uniform(k_b, (1, OUT), dtype=jnp.float32,
                              minval=-bound, maxval=bound)

    # jit so the wrapper pad/transpose plumbing fuses and parameter padding is
    # compiled once per shape.
    fn = jax.jit(interaction_gcn_layer)
    out = fn(agent_feats, agent_pos, weight, bias)
    out = jax.block_until_ready(out)

    ref = _reference(agent_feats, agent_pos, weight, bias)
    assert out.shape == (B, N, OUT)
    # Kernel uses (A/deg)@(X@W) regrouping and an EUP approx reciprocal for the
    # degree normalization (mathematically equal; ~1e-6 relative error).
    assert jnp.allclose(out, ref, atol=1e-3, rtol=1e-3)

    print("KERNEL_OK")
</pallas_src>

<mosaic_0001>
module attributes {stable_mosaic.version = 11 : i64} {
  func.func @_gcn_kernel(%arg0: i32, %arg1: memref<1x16x32xf32, #tpu.memory_space<vmem>>, %arg2: memref<1x16x2xf32, #tpu.memory_space<vmem>>, %arg3: memref<1x2x16xf32, #tpu.memory_space<vmem>>, %arg4: memref<32x128xf32, #tpu.memory_space<vmem>>, %arg5: memref<1x128xf32, #tpu.memory_space<vmem>>, %arg6: memref<1x16x128xf32, #tpu.memory_space<vmem>>) attributes {dimension_semantics = [#tpu.dimension_semantics<parallel>], iteration_bounds = array<i64: 2>, scalar_prefetch = 0 : i64, scratch_operands = 0 : i64, tpu.core_type = #tpu.core_type<tc>, window_params = [{transform_indices = @transform_0, window_bounds = array<i64: 1, 16, 32>}, {transform_indices = @transform_1, window_bounds = array<i64: 1, 16, 2>}, {transform_indices = @transform_2, window_bounds = array<i64: 1, 2, 16>}, {pipeline_mode = #tpu.pipeline_mode<synchronous>, transform_indices = @transform_3, window_bounds = array<i64: 32, 128>}, {pipeline_mode = #tpu.pipeline_mode<synchronous>, transform_indices = @transform_4, window_bounds = array<i64: 1, 128>}, {transform_indices = @transform_5, window_bounds = array<i64: 1, 16, 128>}]} {
    %c0 = arith.constant 0 : index
    %c0_0 = arith.constant 0 : index
    %c0_1 = arith.constant 0 : index
    %0 = vector.load %arg2[%c0, %c0_0, %c0_1] : memref<1x16x2xf32, #tpu.memory_space<vmem>>, vector<1x16x1xf32>
    %1 = vector.shape_cast %0 : vector<1x16x1xf32> to vector<16x1xf32>
    %c0_2 = arith.constant 0 : index
    %c0_3 = arith.constant 0 : index
    %c1 = arith.constant 1 : index
    %2 = vector.load %arg2[%c0_2, %c0_3, %c1] : memref<1x16x2xf32, #tpu.memory_space<vmem>>, vector<1x16x1xf32>
    %3 = vector.shape_cast %2 : vector<1x16x1xf32> to vector<16x1xf32>
    %c0_4 = arith.constant 0 : index
    %c0_5 = arith.constant 0 : index
    %c0_6 = arith.constant 0 : index
    %4 = vector.load %arg3[%c0_4, %c0_5, %c0_6] : memref<1x2x16xf32, #tpu.memory_space<vmem>>, vector<1x1x16xf32>
    %5 = vector.shape_cast %4 : vector<1x1x16xf32> to vector<1x16xf32>
    %c0_7 = arith.constant 0 : index
    %c1_8 = arith.constant 1 : index
    %c0_9 = arith.constant 0 : index
    %6 = vector.load %arg3[%c0_7, %c1_8, %c0_9] : memref<1x2x16xf32, #tpu.memory_space<vmem>>, vector<1x1x16xf32>
    %7 = vector.shape_cast %6 : vector<1x1x16xf32> to vector<1x16xf32>
    %8 = vector.broadcast %1 : vector<16x1xf32> to vector<16x16xf32>
    %9 = vector.broadcast %5 : vector<1x16xf32> to vector<16x16xf32>
    %10 = arith.subf %8, %9 : vector<16x16xf32>
    %11 = vector.broadcast %3 : vector<16x1xf32> to vector<16x16xf32>
    %12 = vector.broadcast %7 : vector<1x16xf32> to vector<16x16xf32>
    %13 = arith.subf %11, %12 : vector<16x16xf32>
    %14 = arith.mulf %10, %10 : vector<16x16xf32>
    %15 = arith.mulf %13, %13 : vector<16x16xf32>
    %16 = arith.addf %14, %15 : vector<16x16xf32>
    %cst = arith.constant 1.000000e+02 : f32
    %17 = vector.broadcast %cst : f32 to vector<16x16xf32>
    %18 = arith.cmpf olt, %16, %17 : vector<16x16xf32>
    %cst_10 = arith.constant 1.000000e+00 : f32
    %cst_11 = arith.constant 0.000000e+00 : f32
    %19 = vector.broadcast %cst_10 : f32 to vector<16x16xf32>
    %20 = vector.broadcast %cst_11 : f32 to vector<16x16xf32>
    %21 = arith.select %18, %19, %20 : vector<16x16xi1>, vector<16x16xf32>
    %cst_12 = arith.constant dense<0.000000e+00> : vector<16xf32>
    %22 = vector.multi_reduction <add>, %21, %cst_12 [1] : vector<16x16xf32> to vector<16xf32>
    %23 = vector.shape_cast %22 : vector<16xf32> to vector<16x1xf32>
    %cst_13 = arith.constant 1.000000e+00 : f32
    %24 = vector.broadcast %cst_13 : f32 to vector<16x1xf32>
    %25 = arith.maximumf %23, %24 : vector<16x1xf32>
    %26 = tpu.reciprocal %25 {approx = true} : vector<16x1xf32> -> vector<16x1xf32>
    %c0_14 = arith.constant 0 : index
    %c0_15 = arith.constant 0 : index
    %c0_16 = arith.constant 0 : index
    %27 = vector.load %arg1[%c0_14, %c0_15, %c0_16] : memref<1x16x32xf32, #tpu.memory_space<vmem>>, vector<1x16x32xf32>
    %28 = vector.shape_cast %27 : vector<1x16x32xf32> to vector<16x32xf32>
    %c0_17 = arith.constant 0 : index
    %c0_18 = arith.constant 0 : index
    %29 = vector.load %arg4[%c0_17, %c0_18] : memref<32x128xf32, #tpu.memory_space<vmem>>, vector<32x128xf32>
    %cst_19 = arith.constant dense<0.000000e+00> : vector<16x128xf32>
    %30 = tpu.matmul %28, %29, %cst_19 {dimension_numbers = #tpu.dot_dimension_numbers<[1], [0], [0], [1], [0, 0, 1, 1], [], []>} : vector<16x32xf32>, vector<32x128xf32>, vector<16x128xf32> -> vector<16x128xf32>
    %31 = vector.broadcast %26 : vector<16x1xf32> to vector<16x16xf32>
    %32 = arith.mulf %21, %31 : vector<16x16xf32>
    %cst_20 = arith.constant dense<0.000000e+00> : vector<16x128xf32>
    %33 = tpu.matmul %32, %30, %cst_20 {dimension_numbers = #tpu.dot_dimension_numbers<[1], [0], [0], [1], [0, 0, 1, 1], [], []>} : vector<16x16xf32>, vector<16x128xf32>, vector<16x128xf32> -> vector<16x128xf32>
    %c0_21 = arith.constant 0 : index
    %c0_22 = arith.constant 0 : index
    %34 = vector.load %arg5[%c0_21, %c0_22] : memref<1x128xf32, #tpu.memory_space<vmem>>, vector<1x128xf32>
    %35 = vector.broadcast %34 : vector<1x128xf32> to vector<16x128xf32>
    %36 = arith.addf %33, %35 : vector<16x128xf32>
    %cst_23 = arith.constant 0.000000e+00 : f32
    %37 = vector.broadcast %cst_23 : f32 to vector<16x128xf32>
    %38 = arith.maximumf %36, %37 : vector<16x128xf32>
    %c0_24 = arith.constant 0 : index
    %c0_25 = arith.constant 0 : index
    %c0_26 = arith.constant 0 : index
    %39 = vector.load %arg6[%c0_24, %c0_25, %c0_26] : memref<1x16x128xf32, #tpu.memory_space<vmem>>, vector<1x16x128xf32>
    %40 = vector.shape_cast %39 : vector<1x16x128xf32> to vector<16x128xf32>
    %41 = vector.shape_cast %38 : vector<16x128xf32> to vector<1x16x128xf32>
    tpu.vector_store %arg6[%c0_24, %c0_25, %c0_26], %41 {strides = array<i32>} : memref<1x16x128xf32, #tpu.memory_space<vmem>>, vector<1x16x128xf32>,
    return
  }
  func.func @transform_0(%arg0: i32) -> (i32, i32, i32) {
    %c0_i32 = arith.constant 0 : i32
    %c0_i32_0 = arith.constant 0 : i32
    %c0_i32_1 = arith.constant 0 : i32
    return %arg0, %c0_i32, %c0_i32_0 : i32, i32, i32
  }
  func.func @transform_1(%arg0: i32) -> (i32, i32, i32) {
    %c0_i32 = arith.constant 0 : i32
    %c0_i32_0 = arith.constant 0 : i32
    %c0_i32_1 = arith.constant 0 : i32
    return %arg0, %c0_i32, %c0_i32_0 : i32, i32, i32
  }
  func.func @transform_2(%arg0: i32) -> (i32, i32, i32) {
    %c0_i32 = arith.constant 0 : i32
    %c0_i32_0 = arith.constant 0 : i32
    %c0_i32_1 = arith.constant 0 : i32
    return %arg0, %c0_i32, %c0_i32_0 : i32, i32, i32
  }
  func.func @transform_3(%arg0: i32) -> (i32, i32) {
    %c0_i32 = arith.constant 0 : i32
    %c0_i32_0 = arith.constant 0 : i32
    %c0_i32_1 = arith.constant 0 : i32
    return %c0_i32, %c0_i32_0 : i32, i32
  }
  func.func @transform_4(%arg0: i32) -> (i32, i32) {
    %c0_i32 = arith.constant 0 : i32
    %c0_i32_0 = arith.constant 0 : i32
    %c0_i32_1 = arith.constant 0 : i32
    return %c0_i32, %c0_i32_0 : i32, i32
  }
  func.func @transform_5(%arg0: i32) -> (i32, i32, i32) {
    %c0_i32 = arith.constant 0 : i32
    %c0_i32_0 = arith.constant 0 : i32
    %c0_i32_1 = arith.constant 0 : i32
    return %arg0, %c0_i32, %c0_i32_0 : i32, i32, i32
  }
}

</mosaic_0001>

<llo_original>
// kernel: interaction_gcn_layer.1
$region0: #{interaction_gcn_layer.1}
  #allocation0 [shape = 'u32[]', space=smem, size = 0x4, offset = 0x4, fixed_abs, tag = 'smem constant byte address 0x4 - core index']
  #allocation1 [shape = 'u32[144,128]{1,0:T(1,128)}', space=vmem, size = 0x12000, scoped, tag = 'internal scratch']
  %s0 = inlined_call_operand.vmem [shape: f32[2,16,32], index: 0, kind: input, shape index: {}]
  %s1 = inlined_call_operand.vmem [shape: f32[2,16,2], index: 1, kind: input, shape index: {}]
  %s2 = inlined_call_operand.vmem [shape: f32[2,2,16], index: 2, kind: input, shape index: {}]
  %s3 = inlined_call_operand.vmem [shape: f32[32,128], index: 3, kind: input, shape index: {}]
  %s4 = inlined_call_operand.vmem [shape: f32[1,128], index: 4, kind: input, shape index: {}]
  %s5 = inlined_call_operand.hbm [shape: f32[2,16,128], index: 5, kind: output, shape index: {}]
  %s6 = sld [smem:[#allocation0]]
  $region53: #{interaction_gcn_layer.1} parent=0
    _
  %s8 = ssub.s32 1, %s6
  %s9 = scalar_select 0, %s8, %s6
  $region1: #{interaction_gcn_layer.1} parent=0
    #allocation2 [shape = 'u8[16384]{0}', space=vmem, size = 0x4000, scoped, tag = 'output window, operand 0']
    #allocation3 [shape = 's32[2]{0}', space=sflag, size = 0x8, scoped, tag = 'scoped memory for interaction_gcn_layer.1']
    %10 = vsyncpa [#allocation3], 0
    %s11 = scalar_lea.sflag [#allocation3], 1
    %12 = vsyncpa %s11, 0
    loop: start=0, step=1, limit=4
    $region2: #{interaction_gcn_layer.1} parent=1 // loop_pre_header
      _
    $region3: #{interaction_gcn_layer.1} parent=1 // loop_header
      %s14 = sphi 0, %s18
      %p15 = scmp.ge.s32.totalorder %s14, 4
      %s24 = sphi 0, %s26
      %s27 = sphi 0, %s24
      %s28 = sphi 0, %s27
      %s44 = sphi 0, %s28
      %s50 = sphi 0, %s52
      %s53 = sphi 0, %s50
      %s54 = sphi 0, %s53
      %s70 = sphi 0, %s54
      %s76 = sphi 0, %s78
      %s79 = sphi 0, %s76
      %s80 = sphi 0, %s79
      %s96 = sphi 0, %s80
      %s100 = sphi 0, %s100
      %s102 = sphi 0, %s100
      %s103 = sphi 0, %s102
      %s117 = sphi 0, %s103
      %s121 = sphi 0, %s121
      %s123 = sphi 0, %s121
      %s124 = sphi 0, %s123
      %s138 = sphi 0, %s124
      %s144 = sphi 0, %s146
      %s147 = sphi 0, %s144
      %s148 = sphi 0, %s147
      %s164 = sphi 0, %s148
    $region4: #{interaction_gcn_layer.1} parent=1 // loop_header_branch
      %17 = sbr.rel (%p15) target = $region8
    $region5: #{interaction_gcn_layer.1} parent=1 // loop_body
      %s19 = ssub.s32 %s14, 1
      %s20 = ssub.s32 %s14, 2
      %s21 = sadd.s32 %s14, 1
      %s22 = ssub.s32 %s14, %s21
      %p23 = scmp.eq.s32.totalorder %s22, 0
      %s25 = sadd.s32 %s24, 1
      %s26 = scalar_select %p23, %s24, %s25
      %p29 = pneg %p23
      %p30 = scmp.eq.s32.totalorder %s14, 1
      %p31 = por %p29, %p30
      %p32 = scmp.ne.s32.totalorder %s24, %s27
      %p33 = scmp.eq.s32.totalorder %s14, 0
      %p34 = por %p32, %p33
      %p35 = scmp.ne.s32.totalorder %s24, %s27
      %p36 = scmp.eq.s32.totalorder %s19, 1
      %p37 = por %p35, %p36
      %p38 = scmp.ne.s32.totalorder %s27, %s28
      %p39 = scmp.eq.s32.totalorder %s19, 0
      %p40 = por %p38, %p39
      %p41 = scmp.ne.s32.totalorder %s27, %s28
      %p42 = scmp.eq.s32.totalorder %s20, 1
      %p43 = por %p41, %p42
      %p45 = scmp.ne.s32.totalorder %s28, %s44
      %p46 = scmp.eq.s32.totalorder %s20, 0
      %p47 = por %p45, %p46
      %s48 = ssub.s32 %s14, %s21
      %p49 = scmp.eq.s32.totalorder %s48, 0
      %s51 = sadd.s32 %s50, 1
      %s52 = scalar_select %p49, %s50, %s51
      %p55 = pneg %p49
      %p56 = scmp.eq.s32.totalorder %s14, 1
      %p57 = por %p55, %p56
      %p58 = scmp.ne.s32.totalorder %s50, %s53
      %p59 = scmp.eq.s32.totalorder %s14, 0
      %p60 = por %p58, %p59
      %p61 = scmp.ne.s32.totalorder %s50, %s53
      %p62 = scmp.eq.s32.totalorder %s19, 1
      %p63 = por %p61, %p62
      %p64 = scmp.ne.s32.totalorder %s53, %s54
      %p65 = scmp.eq.s32.totalorder %s19, 0
      %p66 = por %p64, %p65
      %p67 = scmp.ne.s32.totalorder %s53, %s54
      %p68 = scmp.eq.s32.totalorder %s20, 1
      %p69 = por %p67, %p68
      %p71 = scmp.ne.s32.totalorder %s54, %s70
      %p72 = scmp.eq.s32.totalorder %s20, 0
      %p73 = por %p71, %p72
      %s74 = ssub.s32 %s14, %s21
      %p75 = scmp.eq.s32.totalorder %s74, 0
      %s77 = sadd.s32 %s76, 1
      %s78 = scalar_select %p75, %s76, %s77
      %p81 = pneg %p75
      %p82 = scmp.eq.s32.totalorder %s14, 1
      %p83 = por %p81, %p82
      %p84 = scmp.ne.s32.totalorder %s76, %s79
      %p85 = scmp.eq.s32.totalorder %s14, 0
      %p86 = por %p84, %p85
      %p87 = scmp.ne.s32.totalorder %s76, %s79
      %p88 = scmp.eq.s32.totalorder %s19, 1
      %p89 = por %p87, %p88
      %p90 = scmp.ne.s32.totalorder %s79, %s80
      %p91 = scmp.eq.s32.totalorder %s19, 0
      %p92 = por %p90, %p91
      %p93 = scmp.ne.s32.totalorder %s79, %s80
      %p94 = scmp.eq.s32.totalorder %s20, 1
      %p95 = por %p93, %p94
      %p97 = scmp.ne.s32.totalorder %s80, %s96
      %p98 = scmp.eq.s32.totalorder %s20, 0
      %p99 = por %p97, %p98
      %s101 = sadd.s32 %s100, 1
      %p104 = scmp.eq.s32.totalorder %s14, 1
      %p105 = scmp.ne.s32.totalorder %s100, %s102
      %p106 = scmp.eq.s32.totalorder %s14, 0
      %p107 = por %p105, %p106
      %p108 = scmp.ne.s32.totalorder %s100, %s102
      %p109 = scmp.eq.s32.totalorder %s19, 1
      %p110 = por %p108, %p109
      %p111 = scmp.ne.s32.totalorder %s102, %s103
      %p112 = scmp.eq.s32.totalorder %s19, 0
      %p113 = por %p111, %p112
      %p114 = scmp.ne.s32.totalorder %s102, %s103
      %p115 = scmp.eq.s32.totalorder %s20, 1
      %p116 = por %p114, %p115
      %p118 = scmp.ne.s32.totalorder %s103, %s117
      %p119 = scmp.eq.s32.totalorder %s20, 0
      %p120 = por %p118, %p119
      %s122 = sadd.s32 %s121, 1
      %p125 = scmp.eq.s32.totalorder %s14, 1
      %p126 = scmp.ne.s32.totalorder %s121, %s123
      %p127 = scmp.eq.s32.totalorder %s14, 0
      %p128 = por %p126, %p127
      %p129 = scmp.ne.s32.totalorder %s121, %s123
      %p130 = scmp.eq.s32.totalorder %s19, 1
      %p131 = por %p129, %p130
      %p132 = scmp.ne.s32.totalorder %s123, %s124
      %p133 = scmp.eq.s32.totalorder %s19, 0
      %p134 = por %p132, %p133
      %p135 = scmp.ne.s32.totalorder %s123, %s124
      %p136 = scmp.eq.s32.totalorder %s20, 1
      %p137 = por %p135, %p136
      %p139 = scmp.ne.s32.totalorder %s124, %s138
      %p140 = scmp.eq.s32.totalorder %s20, 0
      %p141 = por %p139, %p140
      %s142 = ssub.s32 %s14, %s21
      %p143 = scmp.eq.s32.totalorder %s142, 0
      %s145 = sadd.s32 %s144, 1
      %s146 = scalar_select %p143, %s144, %s145
      %p149 = pneg %p143
      %p150 = scmp.eq.s32.totalorder %s14, 1
      %p151 = por %p149, %p150
      %p152 = scmp.ne.s32.totalorder %s144, %s147
      %p153 = scmp.eq.s32.totalorder %s14, 0
      %p154 = por %p152, %p153
      %p155 = scmp.ne.s32.totalorder %s144, %s147
      %p156 = scmp.eq.s32.totalorder %s19, 1
      %p157 = por %p155, %p156
      %p158 = scmp.ne.s32.totalorder %s147, %s148
      %p159 = scmp.eq.s32.totalorder %s19, 0
      %p160 = por %p158, %p159
      %p161 = scmp.ne.s32.totalorder %s147, %s148
      %p162 = scmp.eq.s32.totalorder %s20, 1
      %p163 = por %p161, %p162
      %p165 = scmp.ne.s32.totalorder %s148, %s164
      %p166 = scmp.eq.s32.totalorder %s20, 0
      %p167 = por %p165, %p166
      %p168 = scmp.le.s32.totalorder 1, %s14
      %p169 = scmp.lt.s32.totalorder %s14, 3
      %p170 = pnand %p168, %p169
      %p171 = pneg %p170
      // Predicated region
      $region9: #{interaction_gcn_layer.1} parent=5 // pred_check
        _
      $region10: #{interaction_gcn_layer.1} parent=5 // pred_check_branch
        %173 = sbr.rel (%p170) target = $region12
      $region11: #{interaction_gcn_layer.1} parent=5 // pred_region
        %s174 = ssub.s32 %s14, 1
        // Predicated region
        $region13: #{interaction_gcn_layer.1} parent=11 // pred_check
          %p175 = pneg %p113
        $region14: #{interaction_gcn_layer.1} parent=11 // pred_check_branch
          %177 = sbr.rel (%p175) target = $region16
        $region15: #{interaction_gcn_layer.1} parent=11 // pred_region
          _
        $region16: #{interaction_gcn_layer.1} parent=11 // pred_fallthru
          _
        // Predicated region
        $region17: #{interaction_gcn_layer.1} parent=11 // pred_check
          %p178 = pneg %p134
        $region18: #{interaction_gcn_layer.1} parent=11 // pred_check_branch
          %180 = sbr.rel (%p178) target = $region20
        $region19: #{interaction_gcn_layer.1} parent=11 // pred_region
          _
        $region20: #{interaction_gcn_layer.1} parent=11 // pred_fallthru
          _
      $region12: #{interaction_gcn_layer.1} parent=5 // pred_fallthru
        _
      %p181 = scmp.lt.s32.totalorder %s14, 2
      // Predicated region
      $region21: #{interaction_gcn_layer.1} parent=5 // pred_check
        %p182 = pneg %p181
      $region22: #{interaction_gcn_layer.1} parent=5 // pred_check_branch
        %184 = sbr.rel (%p182) target = $region24
      $region23: #{interaction_gcn_layer.1} parent=5 // pred_region
        // Predicated region
        $region25: #{interaction_gcn_layer.1} parent=23 // pred_check
          %p185 = pneg %p34
        $region26: #{interaction_gcn_layer.1} parent=23 // pred_check_branch
          %187 = sbr.rel (%p185) target = $region28
        $region27: #{interaction_gcn_layer.1} parent=23 // pred_region
          %p188 = scmp.lt.s32.totalorder %s14, 1
          %s189 = scalar_select %p188, %s14, 1
          %s190 = smul.addr %s189, 2
          %s191 = smul.addr %s190, 8
          %s192 = scalar_lea.vmem %s0, %s191
        $region28: #{interaction_gcn_layer.1} parent=23 // pred_fallthru
          _
        // Predicated region
        $region29: #{interaction_gcn_layer.1} parent=23 // pred_check
          %p193 = pneg %p60
        $region30: #{interaction_gcn_layer.1} parent=23 // pred_check_branch
          %195 = sbr.rel (%p193) target = $region32
        $region31: #{interaction_gcn_layer.1} parent=23 // pred_region
          %p196 = scmp.lt.s32.totalorder %s14, 1
          %s197 = scalar_select %p196, %s14, 1
          %s198 = smul.addr %s197, 2
          %s199 = smul.addr %s198, 8
          %s200 = scalar_lea.vmem %s1, %s199
        $region32: #{interaction_gcn_layer.1} parent=23 // pred_fallthru
          _
        // Predicated region
        $region33: #{interaction_gcn_layer.1} parent=23 // pred_check
          %p201 = pneg %p86
        $region34: #{interaction_gcn_layer.1} parent=23 // pred_check_branch
          %203 = sbr.rel (%p201) target = $region36
        $region35: #{interaction_gcn_layer.1} parent=23 // pred_region
          %p204 = scmp.lt.s32.totalorder %s14, 1
          %s205 = scalar_select %p204, %s14, 1
          %s206 = smul.addr %s205, 2
          %s207 = scalar_lea.vmem %s2, %s206
        $region36: #{interaction_gcn_layer.1} parent=23 // pred_fallthru
          _
      $region24: #{interaction_gcn_layer.1} parent=5 // pred_fallthru
        _
      %p208 = scmp.le.s32.totalorder 1, %s14
      %p209 = scmp.lt.s32.totalorder %s14, 3
      %p210 = pnand %p208, %p209
      %p211 = pneg %p210
      // Predicated region
      $region37: #{interaction_gcn_layer.1} parent=5 // pred_check
        _
      $region38: #{interaction_gcn_layer.1} parent=5 // pred_check_branch
        %213 = sbr.rel (%p210) target = $region40
      $region39: #{interaction_gcn_layer.1} parent=5 // pred_region
        %s214 = ssub.s32 %s14, 1
        %p215 = scmp.lt.s32.totalorder %s19, 1
        %s216 = scalar_select %p215, %s19, 1
        %s217 = smul.addr %s216, 2
        %s218 = smul.addr %s217, 8
        %s219 = scalar_lea.vmem %s0, %s218
        %p220 = pneg %p40
        %p221 = pneg %p37
        %p222 = scmp.lt.s32.totalorder %s19, 1
        %s223 = scalar_select %p222, %s19, 1
        %s224 = smul.addr %s223, 2
        %s225 = smul.addr %s224, 8
        %s226 = scalar_lea.vmem %s1, %s225
        %p227 = pneg %p66
        %p228 = pneg %p63
        %p229 = scmp.lt.s32.totalorder %s19, 1
        %s230 = scalar_select %p229, %s19, 1
        %s231 = smul.addr %s230, 2
        %s232 = scalar_lea.vmem %s2, %s231
        %p233 = pneg %p92
        %p234 = pneg %p89
        %p235 = pneg %p113
        %p236 = pneg %p110
        %p237 = pneg %p134
        %p238 = pneg %p131
        %p239 = pneg %p160
        %p240 = pneg %p157
        %s241 = sand.u32 %s147, 1
        %s242 = scalar_lea.sflag [#allocation3], %s241
        %s243 = sand.u32 %s147, 1
        %s244 = smul.addr %s243, 16
        %s245 = scalar_lea.vmem [#allocation2], %s244
        %p246 = scmp.lt.s32.totalorder %s19, 1
        %s247 = scalar_select %p246, %s19, 1
        %s248 = smul.addr %s247, 2
        %s249 = smul.addr %s248, 8
        %s250 = scalar_lea.vmem %s0, %s249
        %p251 = scmp.lt.s32.totalorder %s19, 1
        %s252 = scalar_select %p251, %s19, 1
        %s253 = smul.addr %s252, 2
        %s254 = smul.addr %s253, 8
        %s255 = scalar_lea.vmem %s1, %s254
        %p256 = scmp.lt.s32.totalorder %s19, 1
        %s257 = scalar_select %p256, %s19, 1
        %s258 = smul.addr %s257, 2
        %s259 = scalar_lea.vmem %s2, %s258
        %v260 = vld [vmem:[%s255] sm:$0xff]
        %v261 = vld [vmem:[%s255 + $0x8] sm:$0xff]
        %v262 = vld [vmem:[%s259] sm:$0x1]
        %v263 = vld [vmem:[%s259 + $0x1] sm:$0x1]
        %265 = vset.pattern.permute.xlu0 0
        %266 = vperm.xlu0 %265, %v260
        %v267 = vpop.permute.xlu0 %266
        %270 = vset.pattern.permute.xlu0 0
        %271 = vperm.xlu0 %270, %v261
        %v272 = vpop.permute.xlu0 %271
        %v274 = vlaneseq
        %v275 = vshrl.u32 %v274, 7
        %v276 = vsub.s32 0, %v275
        %v277 = vrot.slane %v262, %v276
        %v278 = vsub.f32 %v267, %v277
        %v279 = vsub.f32 %v272, %v277
        %280 = vset.pattern.permute.xlu0 1
        %281 = vperm.xlu0 %280, %v260
        %v282 = vpop.permute.xlu0 %281
        %284 = vset.pattern.permute.xlu0 1
        %285 = vperm.xlu0 %284, %v261
        %v286 = vpop.permute.xlu0 %285
        %v288 = vlaneseq
        %v289 = vshrl.u32 %v288, 7
        %v290 = vsub.s32 0, %v289
        %v291 = vrot.slane %v263, %v290
        %v292 = vsub.f32 %v282, %v291
        %v293 = vsub.f32 %v286, %v291
        %v294 = vmul.f32 %v278, %v278
        %v295 = vmul.f32 %v279, %v279
        %v296 = vmul.f32 %v292, %v292
        %v297 = vmul.f32 %v293, %v293
        %v298 = vadd.f32 %v294, %v296
        %v299 = vadd.f32 %v295, %v297
        %vm300 = vcmp.lt.f32.partialorder %v298, 100.0
        %vm301 = vcmp.lt.f32.partialorder %v299, 100.0
        %v302 = vsel %vm300, 1.0, 0.0
        %v303 = vsel %vm301, 1.0, 0.0
        %vm304 = vcmask 130048
        %v305 = vsel %vm304, %v302, 0.0
        %306 = vadd.xlane.f32.xlu0 %v305
        %v307 = vpop.xlane.xlu0 %306
        %v308 = vsel %vm304, %v303, 0.0
        %309 = vadd.xlane.f32.xlu0 %v308
        %v310 = vpop.xlane.xlu0 %309
        %v311 = vmax.f32 %v307, 1.0
        %v312 = vmax.f32 %v310, 1.0
        %v313 = vrcp.pop %v311
        %v314 = vrcp.pop %v312
        %v315 = vld [vmem:[%s250] sm:$0xff]
        %v316 = vld [vmem:[%s250 + $0x8] sm:$0xff]
        %v317 = vld [vmem:[%s3] sm:$0xff]
        %v318 = vld [vmem:[%s3 + $0x8] sm:$0xff]
        %v319 = vld [vmem:[%s3 + $0x10] sm:$0xff]
        %v320 = vld [vmem:[%s3 + $0x18] sm:$0xff]
        %vm321 = vcmask 261120
        %v323 = vsel %vm321, %v315, 0
        %v326 = vsel %vm321, %v316, 0
        %328 = vmatprep.subr.mxu0 0.0
        %329 = vmatpush1.msra.mxu0 %v317
        %330 = vmatprep.subr.mxu0 0.0
        %331 = vmatpush1.msra.mxu0 %v318
        %332 = vmatprep.subr.mxu0 0.0
        %333 = vmatpush1.msra.mxu0 %v319
        %334 = vmatprep.subr.mxu0 0.0
        %335 = vmatpush1.msra.mxu0 %v320
        %336 = vmatprep.subr.mxu0 0.0
        %337 = vmatpush1.msra.mxu0 0.0
        %338 = vmatprep.subr.mxu0 0.0
        %339 = vmatpush1.msra.mxu0 0.0
        %340 = vmatprep.subr.mxu0 0.0
        %341 = vmatpush1.msra.mxu0 0.0
        %342 = vmatprep.subr.mxu0 0.0
        %343 = vmatpush1.msra.mxu0 0.0
        %344 = vmatprep.subr.mxu0 0.0
        %345 = vmatpush1.msra.mxu0 0.0
        %346 = vmatprep.subr.mxu0 0.0
        %347 = vmatpush1.msra.mxu0 0.0
        %348 = vmatprep.subr.mxu0 0.0
        %349 = vmatpush1.msra.mxu0 0.0
        %350 = vmatprep.subr.mxu0 0.0
        %351 = vmatpush1.msra.mxu0 0.0
        %352 = vmatprep.subr.mxu0 0.0
        %353 = vmatpush1.msra.mxu0 0.0
        %354 = vmatprep.subr.mxu0 0.0
        %355 = vmatpush1.msra.mxu0 0.0
        %356 = vmatprep.subr.mxu0 0.0
        %357 = vmatpush1.msra.mxu0 0.0
        %358 = vmatprep.subr.mxu0 0.0
        %359 = vmatpush1.msra.mxu0 0.0
        %360 = vmatprep.subr.mxu0 0.0
        %361 = vmatpush1.msra.mxu0 0.0
        %362 = vmatprep.subr.mxu0 0.0
        %363 = vmatpush1.msra.mxu0 0.0
        %364 = vmatprep.subr.mxu0 0.0
        %365 = vmatpush1.msra.mxu0 0.0
        %366 = vmatprep.subr.mxu0 0.0
        %367 = vmatpush1.msra.mxu0 0.0
        %368 = vmatprep.subr.mxu0 0.0
        %369 = vmatpush1.msra.mxu0 0.0
        %370 = vmatprep.subr.mxu0 0.0
        %371 = vmatpush1.msra.mxu0 0.0
        %372 = vmatprep.subr.mxu0 0.0
        %373 = vmatpush1.msra.mxu0 0.0
        %374 = vmatprep.subr.mxu0 0.0
        %375 = vmatpush1.msra.mxu0 0.0
        %376 = vmatprep.subr.mxu0 0.0
        %377 = vmatpush1.msra.mxu0 0.0
        %378 = vmatprep.subr.mxu0 0.0
        %379 = vmatpush1.msra.mxu0 0.0
        %380 = vmatprep.subr.mxu0 0.0
        %381 = vmatpush1.msra.mxu0 0.0
        %382 = vmatprep.subr.mxu0 0.0
        %383 = vmatpush1.msra.mxu0 0.0
        %384 = vmatprep.subr.mxu0 0.0
        %385 = vmatpush1.msra.mxu0 0.0
        %386 = vmatprep.subr.mxu0 0.0
        %387 = vmatpush1.msra.mxu0 0.0
        %388 = vmatprep.subr.mxu0 0.0
        %389 = vmatpush1.msra.mxu0 0.0
        %390 = vmatprep.subr.mxu0 0.0
        %391 = vmatpush1.msra.mxu0 0.0
        %392 = vmatprep.mubr.f32.mxu0 0.0
        %393 = vmatmul.mubr.f32.gmra.mrb[0].mxu0 %v323
        %v394 = vpop.f32.mrb[0].mxu0
        %v395 = vadd.f32 0.0, %v394
        %v396 = vpop.f32.mrb[0].mxu0
        %397 = vmatprep.mubr.f32.mxu0 0.0
        %398 = vmatmul.mubr.f32.gmra.mrb[0].mxu0 %v326
        %v399 = vpop.f32.mrb[0].mxu0
        %v400 = vadd.f32 0.0, %v399
        %v401 = vpop.f32.mrb[0].mxu0
        %402 = vdwg.mxu0
        %v403 = vmul.f32 %v302, %v313
        %v404 = vmul.f32 %v303, %v314
        %v405 = vld [vmem:[%s4] sm:$0x1]
        %v407 = vlaneseq
        %v408 = vshrl.u32 %v407, 7
        %v409 = vsub.s32 0, %v408
        %v410 = vrot.slane %v405, %v409
        %v413 = vsel %vm304, %v403, 0
        %v416 = vsel %vm304, %v404, 0
        %418 = vmatprep.subr.mxu0 0.0
        %419 = vmatpush1.msra.mxu0 %v395
        %420 = vmatprep.subr.mxu0 0.0
        %421 = vmatpush1.msra.mxu0 %v400
        %422 = vmatprep.subr.mxu0 0.0
        %423 = vmatpush1.msra.mxu0 0.0
        %424 = vmatprep.subr.mxu0 0.0
        %425 = vmatpush1.msra.mxu0 0.0
        %426 = vmatprep.subr.mxu0 0.0
        %427 = vmatpush1.msra.mxu0 0.0
        %428 = vmatprep.subr.mxu0 0.0
        %429 = vmatpush1.msra.mxu0 0.0
        %430 = vmatprep.subr.mxu0 0.0
        %431 = vmatpush1.msra.mxu0 0.0
        %432 = vmatprep.subr.mxu0 0.0
        %433 = vmatpush1.msra.mxu0 0.0
        %434 = vmatprep.subr.mxu0 0.0
        %435 = vmatpush1.msra.mxu0 0.0
        %436 = vmatprep.subr.mxu0 0.0
        %437 = vmatpush1.msra.mxu0 0.0
        %438 = vmatprep.subr.mxu0 0.0
        %439 = vmatpush1.msra.mxu0 0.0
        %440 = vmatprep.subr.mxu0 0.0
        %441 = vmatpush1.msra.mxu0 0.0
        %442 = vmatprep.subr.mxu0 0.0
        %443 = vmatpush1.msra.mxu0 0.0
        %444 = vmatprep.subr.mxu0 0.0
        %445 = vmatpush1.msra.mxu0 0.0
        %446 = vmatprep.subr.mxu0 0.0
        %447 = vmatpush1.msra.mxu0 0.0
        %448 = vmatprep.subr.mxu0 0.0
        %449 = vmatpush1.msra.mxu0 0.0
        %450 = vmatprep.subr.mxu0 0.0
        %451 = vmatpush1.msra.mxu0 0.0
        %452 = vmatprep.subr.mxu0 0.0
        %453 = vmatpush1.msra.mxu0 0.0
        %454 = vmatprep.subr.mxu0 0.0
        %455 = vmatpush1.msra.mxu0 0.0
        %456 = vmatprep.subr.mxu0 0.0
        %457 = vmatpush1.msra.mxu0 0.0
        %458 = vmatprep.subr.mxu0 0.0
        %459 = vmatpush1.msra.mxu0 0.0
        %460 = vmatprep.subr.mxu0 0.0
        %461 = vmatpush1.msra.mxu0 0.0
        %462 = vmatprep.subr.mxu0 0.0
        %463 = vmatpush1.msra.mxu0 0.0
        %464 = vmatprep.subr.mxu0 0.0
        %465 = vmatpush1.msra.mxu0 0.0
        %466 = vmatprep.subr.mxu0 0.0
        %467 = vmatpush1.msra.mxu0 0.0
        %468 = vmatprep.subr.mxu0 0.0
        %469 = vmatpush1.msra.mxu0 0.0
        %470 = vmatprep.subr.mxu0 0.0
        %471 = vmatpush1.msra.mxu0 0.0
        %472 = vmatprep.subr.mxu0 0.0
        %473 = vmatpush1.msra.mxu0 0.0
        %474 = vmatprep.subr.mxu0 0.0
        %475 = vmatpush1.msra.mxu0 0.0
        %476 = vmatprep.subr.mxu0 0.0
        %477 = vmatpush1.msra.mxu0 0.0
        %478 = vmatprep.subr.mxu0 0.0
        %479 = vmatpush1.msra.mxu0 0.0
        %480 = vmatprep.subr.mxu0 0.0
        %481 = vmatpush1.msra.mxu0 0.0
        %482 = vmatprep.mubr.f32.mxu0 0.0
        %483 = vmatmul.mubr.f32.gmra.mrb[0].mxu0 %v413
        %v484 = vpop.f32.mrb[0].mxu0
        %v485 = vadd.f32 %v410, %v484
        %v486 = vpop.f32.mrb[0].mxu0
        %487 = vmatprep.mubr.f32.mxu0 0.0
        %488 = vmatmul.mubr.f32.gmra.mrb[0].mxu0 %v416
        %v489 = vpop.f32.mrb[0].mxu0
        %v490 = vadd.f32 %v410, %v489
        %v491 = vpop.f32.mrb[0].mxu0
        %492 = vdwg.mxu0
        %v493 = vmax.f32 %v485, 0.0
        %v494 = vmax.f32 %v490, 0.0
        %495 = vst [vmem:[%s245] sm:$0xff] %v493
        %496 = vst [vmem:[%s245 + $0x8] sm:$0xff] %v494
        %s497 = sand.u32 %s147, 1
        %s498 = scalar_lea.sflag [#allocation3], %s497
        %s499 = sand.u32 %s147, 1
        %s500 = smul.addr %s499, 16
        %s501 = scalar_lea.vmem [#allocation2], %s500
        // Predicated region
        $region41: #{interaction_gcn_layer.1} parent=39 // pred_check
          %p502 = pneg %p157
        $region42: #{interaction_gcn_layer.1} parent=39 // pred_check_branch
          %504 = sbr.rel (%p502) target = $region44
        $region43: #{interaction_gcn_layer.1} parent=39 // pred_region
          %s506 = ssub.s32 256, 256
          %507 = vsyncadd %s498, %s506
          %s508 = smul.addr %s19, 2
          %s509 = smul.addr %s508, 128
          %s510 = scalar_lea.hbm %s5, %s509
          %s511 = sshll.u32 %s501, 4
          %s512 = int_to_ptr.vmem [resolvable:$true] %s511
          %517 = dma.vmem_to_hbm [thread:$0]  %s512, 256, %s510, %s498, 128, 128, 8
        $region44: #{interaction_gcn_layer.1} parent=39 // pred_fallthru
          _
      $region40: #{interaction_gcn_layer.1} parent=5 // pred_fallthru
        _
      %p518 = scmp.le.s32.totalorder 2, %s14
      // Predicated region
      $region45: #{interaction_gcn_layer.1} parent=5 // pred_check
        %p519 = pneg %p518
      $region46: #{interaction_gcn_layer.1} parent=5 // pred_check_branch
        %521 = sbr.rel (%p519) target = $region48
      $region47: #{interaction_gcn_layer.1} parent=5 // pred_region
        %s522 = ssub.s32 %s14, 2
        // Predicated region
        $region49: #{interaction_gcn_layer.1} parent=47 // pred_check
          %p523 = pneg %p163
        $region50: #{interaction_gcn_layer.1} parent=47 // pred_check_branch
          %525 = sbr.rel (%p523) target = $region52
        $region51: #{interaction_gcn_layer.1} parent=47 // pred_region
          %s526 = sand.u32 %s148, 1
          %s527 = scalar_lea.sflag [#allocation3], %s526
          %s528 = sand.u32 %s148, 1
          %s529 = smul.addr %s528, 16
          %s530 = scalar_lea.vmem [#allocation2], %s529
          %531 = dma.done %s527, 256
        $region52: #{interaction_gcn_layer.1} parent=47 // pred_fallthru
          _
      $region48: #{interaction_gcn_layer.1} parent=5 // pred_fallthru
        _
    $region6: #{interaction_gcn_layer.1} parent=1 // loop_footer
      %s18 = sadd.s32 1, %s14
    $region7: #{interaction_gcn_layer.1} parent=1 // loop_footer_branch
      %13 = sbr.rel target = $region3
    $region8: #{interaction_gcn_layer.1} parent=1 // loop_exit
      _
    %532 = vsyncpa [#allocation3], 1
    %s533 = scalar_lea.sflag [#allocation3], 1
    %534 = vsyncpa %s533, 1

</llo_original>
